<compile_context>
chip_gen: v7x
topology: tpu7x:2x2x1
jax: 0.10.0
libtpu: 0.0.40
codegen_flags: <defaults>
</compile_context>

<pallas_src>
import jax
import jax.numpy as jnp
from jax.experimental import pallas as pl
from jax.experimental.pallas import tpu as pltpu


# Model constants implied by Net2.
CIN, COUT, KH, KW = 3, 32, 3, 3
H = W = 6
HO, WO = H // 2, W // 2            # 3, 3
NPOS = HO * WO                     # 9 pooled spatial positions
NTAP = 4                           # 2x2 pooling window taps
K_IN = CIN * H * W                 # 108 raw input features per sample
K_PAD = 128                        # lane-padded K for the conv matmuls
S = NPOS * COUT                    # 288 pooled features, ordered (pos, channel)
F_IN = COUT * NPOS                 # 288 (PyTorch flatten size)
F_HID = 128
F_OUT = 10
F_OUT_PAD = 128                    # lane-dense padded output width

# Packed-weight row offsets (all multiples of 8 so every in-kernel slice is
# sublane-aligned).
CONV_BIAS_ROW = NTAP * K_PAD       # 512
CONV_ROWS = CONV_BIAS_ROW + 8      # 520
B1_ROW = F_IN                      # 288
W2_ROW = F_IN + 8                  # 296
B2_ROW = W2_ROW + F_HID            # 424
DENSE_ROWS = B2_ROW + 8            # 432


def _round_up(x, m):
    return (x + m - 1) // m * m


# ----------------------------------------------------------------------------
# Fused Pallas kernel
# ----------------------------------------------------------------------------
def _net2_kernel(x_ref, cw_ref, dw_ref, o_ref):
    """Fused Net2 forward on one batch tile.

    x_ref : (BT, K_PAD)  raw flattened input (lanes >= 108 are zero padding).
    cw_ref: (520, 288)   4 per-pool-tap conv matrices (128 rows each, rows 108..127
                         zero) + conv bias at row 512. DMA'd once, VMEM-resident.
    dw_ref: (432, 128)   w1 (rows 0..287, (pos,channel) order), b1 (row 288),
                         w2 padded to 128 cols (rows 296..423), b2 (row 424).
    o_ref : (BT, 128)    lane-dense output block; cols 10..127 are inert zeros.
    """
    mxu_dt = cw_ref.dtype
    x = x_ref[...].astype(mxu_dt)                                   # (BT, 128)

    # conv1 + ReLU + MaxPool2d(2):
    # the conv is 4 dense (128 -> 288) matmuls on the raw input (one per 2x2 pool
    # tap); the pool is the max tree over the 4 results.  ReLU/pool commute and the
    # bias is tap-invariant, so bias+ReLU are applied once on the pooled (BT, 288).
    def tap(t):
        return jnp.dot(x, cw_ref[t * K_PAD:(t + 1) * K_PAD, :],
                       preferred_element_type=jnp.float32)

    pooled = jnp.maximum(jnp.maximum(tap(0), tap(1)),
                         jnp.maximum(tap(2), tap(3)))               # (BT, 288)
    bconv = cw_ref[CONV_BIAS_ROW:CONV_BIAS_ROW + 1, :].astype(jnp.float32)
    pooled = jnp.maximum(pooled + bconv, 0.0)

    # dense1: single (BT, 288) @ (288, 128) contraction + ReLU.  The NCHW flatten is
    # absorbed into the one-time row permutation of w1 (no in-kernel reshape).
    h = jnp.dot(pooled.astype(mxu_dt), dw_ref[0:F_IN, :],
                preferred_element_type=jnp.float32)
    h = jnp.maximum(h + dw_ref[B1_ROW:B1_ROW + 1, :].astype(jnp.float32), 0.0)

    # dense2: lane-dense (BT, 128) store; columns 10..127 come from zero-padded
    # w2/b2 so they are exactly zero.
    out = jnp.dot(h.astype(mxu_dt), dw_ref[W2_ROW:W2_ROW + F_HID, :],
                  preferred_element_type=jnp.float32)
    o_ref[...] = out + dw_ref[B2_ROW:B2_ROW + 1, :].astype(jnp.float32)


# ----------------------------------------------------------------------------
# One-time parameter repacking
# ----------------------------------------------------------------------------
def prepare_params(params, mxu_dtype=jnp.float32):
    """Repack PyTorch-layout params into two kernel-resident constant slabs.

    conv_pack (520, 288): rows [t*128, t*128+108) hold the dense matrix mapping the
      raw flattened input (cin,h,w) to pool-tap t's pre-activation conv output in
      (pos, channel) order; row 512 holds the conv bias tiled over positions.
    dense_pack (432, 128): w1 (row-permuted), b1, w2 (transposed, column-padded), b2.

    Set mxu_dtype=jnp.bfloat16 on v6e/v7x to halve resident weight bytes and double
    MXU peak (accumulation stays f32 inside the kernel).
    """
    wc, bc, w1, b1, w2, b2 = [jnp.asarray(p, jnp.float32) for p in params]

    # Expand the (bias-free) conv into its matrix form by pushing the identity basis
    # through lax.conv once, reordering outputs to (tap, pos*32 + channel).
    def conv_taps(x_flat):
        x4 = x_flat.reshape(1, CIN, H, W)
        y = jax.lax.conv_general_dilated(
            x4, wc, window_strides=(1, 1), padding=((1, 1), (1, 1)),
            dimension_numbers=("NCHW", "OIHW", "NCHW"))[0]          # (COUT, 6, 6)
        y = y.reshape(COUT, HO, 2, WO, 2).transpose(2, 4, 1, 3, 0)  # (hi,wi,ho,wo,c)
        return y.reshape(NTAP, S)                                   # (4, 288)

    wtaps = jax.vmap(conv_taps, in_axes=0, out_axes=1)(
        jnp.eye(K_IN, dtype=jnp.float32))                           # (4, 108, 288)

    conv_pack = jnp.zeros((CONV_ROWS, S), jnp.float32)
    for t in range(NTAP):
        conv_pack = conv_pack.at[t * K_PAD:t * K_PAD + K_IN].set(wtaps[t])
    conv_pack = conv_pack.at[CONV_BIAS_ROW].set(jnp.tile(bc, NPOS))  # bias, (pos,c)

    # dense1 weight: PyTorch flatten order is (channel, pos); kernel order is
    # (pos, channel).  Permute rows once here.
    w1_perm = (w1.reshape(F_HID, COUT, NPOS)
                 .transpose(2, 1, 0)
                 .reshape(F_IN, F_HID))                              # (288, 128)
    w2_pad = jnp.zeros((F_HID, F_OUT_PAD), jnp.float32).at[:, :F_OUT].set(w2.T)
    b2_pad = jnp.zeros((F_OUT_PAD,), jnp.float32).at[:F_OUT].set(b2)

    dense_pack = jnp.zeros((DENSE_ROWS, F_OUT_PAD), jnp.float32)
    dense_pack = dense_pack.at[0:F_IN].set(w1_perm)
    dense_pack = dense_pack.at[B1_ROW].set(b1)
    dense_pack = dense_pack.at[W2_ROW:W2_ROW + F_HID].set(w2_pad)
    dense_pack = dense_pack.at[B2_ROW].set(b2_pad)

    return conv_pack.astype(mxu_dtype), dense_pack.astype(mxu_dtype)


# ----------------------------------------------------------------------------
# Forward wrapper
# ----------------------------------------------------------------------------
def net2_forward(x, prepared, block_b=128):
    conv_pack, dense_pack = prepared
    B = x.shape[0]
    assert x.shape[1:] == (CIN, H, W), (
        f"Net2 expects ({CIN},{H},{W}) inputs (32*3*3 dense layer), got {x.shape}")

    # Batch tile: multiple of 8 sublanes, capped so intermediates stay small on every
    # generation (weights + tiles + spill << 16 MiB v5e scoped VMEM default).
    bt = min(block_b, _round_up(B, 8))
    b_pad = _round_up(B, bt)
    n_tiles = b_pad // bt

    # Raw flattened input; one cheap flat pad fuses the batch-tail pad and the
    # 108 -> 128 lane pad (still ~9x less HBM traffic than the old im2col patches).
    x_flat = x.reshape(B, K_IN)
    x_flat = jnp.pad(x_flat, ((0, b_pad - B), (0, K_PAD - K_IN)))

    itemsize = jnp.dtype(conv_pack.dtype).itemsize
    flops = 2 * b_pad * (NTAP * K_PAD * S + F_IN * F_HID + F_HID * F_OUT_PAD)
    bytes_accessed = (x_flat.size * 4
                      + (conv_pack.size + dense_pack.size) * itemsize
                      + b_pad * F_OUT_PAD * 4)

    out = pl.pallas_call(
        _net2_kernel,
        out_shape=jax.ShapeDtypeStruct((b_pad, F_OUT_PAD), jnp.float32),
        grid=(n_tiles,),
        in_specs=[
            pl.BlockSpec((bt, K_PAD), lambda i: (i, 0)),         # per-tile input
            pl.BlockSpec(conv_pack.shape, lambda i: (0, 0)),     # resident weights
            pl.BlockSpec(dense_pack.shape, lambda i: (0, 0)),    # resident weights
        ],
        out_specs=pl.BlockSpec((bt, F_OUT_PAD), lambda i: (i, 0)),
        compiler_params=pltpu.CompilerParams(
            dimension_semantics=("parallel",)),
        cost_estimate=pl.CostEstimate(flops=flops, transcendentals=0,
                                      bytes_accessed=bytes_accessed),
    )(x_flat, conv_pack, dense_pack)

    return out[:B, :F_OUT]


# ----------------------------------------------------------------------------
# Deterministic parameter init (PyTorch-style uniform(-1/sqrt(fan_in), +))
# ----------------------------------------------------------------------------
def init_params(key):
    ks = jax.random.split(key, 6)

    def uni(k, shape, fan_in):
        bound = 1.0 / jnp.sqrt(fan_in)
        return jax.random.uniform(k, shape, jnp.float32, -bound, bound)

    wc = uni(ks[0], (COUT, CIN, KH, KW), CIN * KH * KW)
    bc = uni(ks[1], (COUT,), CIN * KH * KW)
    w1 = uni(ks[2], (F_HID, F_IN), F_IN)
    b1 = uni(ks[3], (F_HID,), F_IN)
    w2 = uni(ks[4], (F_OUT, F_HID), F_HID)
    b2 = uni(ks[5], (F_OUT,), F_HID)
    return (wc, bc, w1, b1, w2, b2)


# Pure-JAX reference for verification.
def net2_reference(x, params):
    wc, bc, w1, b1, w2, b2 = params
    conv = jax.lax.conv_general_dilated(
        x, wc, window_strides=(1, 1), padding=((1, 1), (1, 1)),
        dimension_numbers=("NCHW", "OIHW", "NCHW"))
    conv = jax.nn.relu(conv + bc.reshape(1, -1, 1, 1))
    pooled = jax.lax.reduce_window(conv, -jnp.inf, jax.lax.max,
                                   (1, 1, 2, 2), (1, 1, 2, 2), "VALID")
    feat = pooled.reshape(x.shape[0], -1)
    h = jax.nn.relu(feat @ w1.T + b1)
    return h @ w2.T + b2


if __name__ == "__main__":
    key = jax.random.PRNGKey(0)
    kx, kp = jax.random.split(key)

    # Input implied by the module: 3 channels, 6x6 spatial (pool -> 3x3 -> 288).
    x = jax.random.normal(kx, (2, CIN, H, W), dtype=jnp.float32)
    params = init_params(kp)
    prepared = prepare_params(params)      # weight repack done once, outside forward

    fwd = jax.jit(net2_forward)
    out = jax.block_until_ready(fwd(x, prepared))

    ref = net2_reference(x, params)
    assert out.shape == (2, F_OUT), out.shape
    assert jnp.allclose(out, ref, atol=1e-4, rtol=1e-4), (out, ref)

    print("KERNEL_OK")
</pallas_src>

<mosaic_0001>
module attributes {stable_mosaic.version = 11 : i64} {
  func.func @_net2_kernel(%arg0: i32, %arg1: memref<8x128xf32, #tpu.memory_space<vmem>>, %arg2: memref<520x288xf32, #tpu.memory_space<vmem>>, %arg3: memref<432x128xf32, #tpu.memory_space<vmem>>, %arg4: memref<8x128xf32, #tpu.memory_space<vmem>>) attributes {dimension_semantics = [#tpu.dimension_semantics<parallel>], iteration_bounds = array<i64: 1>, scalar_prefetch = 0 : i64, scratch_operands = 0 : i64, tpu.core_type = #tpu.core_type<tc>, window_params = [{transform_indices = @transform_0, window_bounds = array<i64: 8, 128>}, {pipeline_mode = #tpu.pipeline_mode<synchronous>, transform_indices = @transform_1, window_bounds = array<i64: 520, 288>}, {pipeline_mode = #tpu.pipeline_mode<synchronous>, transform_indices = @transform_2, window_bounds = array<i64: 432, 128>}, {transform_indices = @transform_3, window_bounds = array<i64: 8, 128>}]} {
    %c0 = arith.constant 0 : index
    %c0_0 = arith.constant 0 : index
    %0 = vector.load %arg1[%c0, %c0_0] : memref<8x128xf32, #tpu.memory_space<vmem>>, vector<8x128xf32>
    %c0_1 = arith.constant 0 : index
    %c0_2 = arith.constant 0 : index
    %1 = vector.load %arg2[%c0_1, %c0_2] : memref<520x288xf32, #tpu.memory_space<vmem>>, vector<128x288xf32>
    %cst = arith.constant dense<0.000000e+00> : vector<8x288xf32>
    %2 = tpu.matmul %0, %1, %cst {dimension_numbers = #tpu.dot_dimension_numbers<[1], [0], [0], [1], [0, 0, 1, 1], [], []>} : vector<8x128xf32>, vector<128x288xf32>, vector<8x288xf32> -> vector<8x288xf32>
    %c128 = arith.constant 128 : index
    %c0_3 = arith.constant 0 : index
    %3 = vector.load %arg2[%c128, %c0_3] : memref<520x288xf32, #tpu.memory_space<vmem>>, vector<128x288xf32>
    %cst_4 = arith.constant dense<0.000000e+00> : vector<8x288xf32>
    %4 = tpu.matmul %0, %3, %cst_4 {dimension_numbers = #tpu.dot_dimension_numbers<[1], [0], [0], [1], [0, 0, 1, 1], [], []>} : vector<8x128xf32>, vector<128x288xf32>, vector<8x288xf32> -> vector<8x288xf32>
    %5 = arith.maximumf %2, %4 : vector<8x288xf32>
    %c256 = arith.constant 256 : index
    %c0_5 = arith.constant 0 : index
    %6 = vector.load %arg2[%c256, %c0_5] : memref<520x288xf32, #tpu.memory_space<vmem>>, vector<128x288xf32>
    %cst_6 = arith.constant dense<0.000000e+00> : vector<8x288xf32>
    %7 = tpu.matmul %0, %6, %cst_6 {dimension_numbers = #tpu.dot_dimension_numbers<[1], [0], [0], [1], [0, 0, 1, 1], [], []>} : vector<8x128xf32>, vector<128x288xf32>, vector<8x288xf32> -> vector<8x288xf32>
    %c384 = arith.constant 384 : index
    %c0_7 = arith.constant 0 : index
    %8 = vector.load %arg2[%c384, %c0_7] : memref<520x288xf32, #tpu.memory_space<vmem>>, vector<128x288xf32>
    %cst_8 = arith.constant dense<0.000000e+00> : vector<8x288xf32>
    %9 = tpu.matmul %0, %8, %cst_8 {dimension_numbers = #tpu.dot_dimension_numbers<[1], [0], [0], [1], [0, 0, 1, 1], [], []>} : vector<8x128xf32>, vector<128x288xf32>, vector<8x288xf32> -> vector<8x288xf32>
    %10 = arith.maximumf %7, %9 : vector<8x288xf32>
    %11 = arith.maximumf %5, %10 : vector<8x288xf32>
    %c512 = arith.constant 512 : index
    %c0_9 = arith.constant 0 : index
    %12 = vector.load %arg2[%c512, %c0_9] : memref<520x288xf32, #tpu.memory_space<vmem>>, vector<1x288xf32>
    %13 = vector.broadcast %12 : vector<1x288xf32> to vector<8x288xf32>
    %14 = arith.addf %11, %13 : vector<8x288xf32>
    %cst_10 = arith.constant 0.000000e+00 : f32
    %15 = vector.broadcast %cst_10 : f32 to vector<8x288xf32>
    %16 = arith.maximumf %14, %15 : vector<8x288xf32>
    %c0_11 = arith.constant 0 : index
    %c0_12 = arith.constant 0 : index
    %17 = vector.load %arg3[%c0_11, %c0_12] : memref<432x128xf32, #tpu.memory_space<vmem>>, vector<288x128xf32>
    %cst_13 = arith.constant dense<0.000000e+00> : vector<8x128xf32>
    %18 = tpu.matmul %16, %17, %cst_13 {dimension_numbers = #tpu.dot_dimension_numbers<[1], [0], [0], [1], [0, 0, 1, 1], [], []>} : vector<8x288xf32>, vector<288x128xf32>, vector<8x128xf32> -> vector<8x128xf32>
    %c288 = arith.constant 288 : index
    %c0_14 = arith.constant 0 : index
    %19 = vector.load %arg3[%c288, %c0_14] : memref<432x128xf32, #tpu.memory_space<vmem>>, vector<1x128xf32>
    %20 = vector.broadcast %19 : vector<1x128xf32> to vector<8x128xf32>
    %21 = arith.addf %18, %20 : vector<8x128xf32>
    %cst_15 = arith.constant 0.000000e+00 : f32
    %22 = vector.broadcast %cst_15 : f32 to vector<8x128xf32>
    %23 = arith.maximumf %21, %22 : vector<8x128xf32>
    %c296 = arith.constant 296 : index
    %c0_16 = arith.constant 0 : index
    %24 = vector.load %arg3[%c296, %c0_16] : memref<432x128xf32, #tpu.memory_space<vmem>>, vector<128x128xf32>
    %cst_17 = arith.constant dense<0.000000e+00> : vector<8x128xf32>
    %25 = tpu.matmul %23, %24, %cst_17 {dimension_numbers = #tpu.dot_dimension_numbers<[1], [0], [0], [1], [0, 0, 1, 1], [], []>} : vector<8x128xf32>, vector<128x128xf32>, vector<8x128xf32> -> vector<8x128xf32>
    %c424 = arith.constant 424 : index
    %c0_18 = arith.constant 0 : index
    %26 = vector.load %arg3[%c424, %c0_18] : memref<432x128xf32, #tpu.memory_space<vmem>>, vector<1x128xf32>
    %27 = vector.broadcast %26 : vector<1x128xf32> to vector<8x128xf32>
    %28 = arith.addf %25, %27 : vector<8x128xf32>
    %c0_19 = arith.constant 0 : index
    %c0_20 = arith.constant 0 : index
    %29 = vector.load %arg4[%c0_19, %c0_20] : memref<8x128xf32, #tpu.memory_space<vmem>>, vector<8x128xf32>
    tpu.vector_store %arg4[%c0_19, %c0_20], %28 {strides = array<i32>} : memref<8x128xf32, #tpu.memory_space<vmem>>, vector<8x128xf32>,
    return
  }
  func.func @transform_0(%arg0: i32) -> (i32, i32) {
    %c0_i32 = arith.constant 0 : i32
    %c0_i32_0 = arith.constant 0 : i32
    return %arg0, %c0_i32 : i32, i32
  }
  func.func @transform_1(%arg0: i32) -> (i32, i32) {
    %c0_i32 = arith.constant 0 : i32
    %c0_i32_0 = arith.constant 0 : i32
    %c0_i32_1 = arith.constant 0 : i32
    return %c0_i32, %c0_i32_0 : i32, i32
  }
  func.func @transform_2(%arg0: i32) -> (i32, i32) {
    %c0_i32 = arith.constant 0 : i32
    %c0_i32_0 = arith.constant 0 : i32
    %c0_i32_1 = arith.constant 0 : i32
    return %c0_i32, %c0_i32_0 : i32, i32
  }
  func.func @transform_3(%arg0: i32) -> (i32, i32) {
    %c0_i32 = arith.constant 0 : i32
    %c0_i32_0 = arith.constant 0 : i32
    return %arg0, %c0_i32 : i32, i32
  }
}

</mosaic_0001>

<llo_original>
// kernel: net2_forward.1
$region0: #{net2_forward.1}
  #allocation0 [shape = 'u32[]', space=smem, size = 0x4, offset = 0x4, fixed_abs, tag = 'smem constant byte address 0x4 - core index']
  #allocation1 [shape = 'u32[144,128]{1,0:T(1,128)}', space=vmem, size = 0x12000, scoped, tag = 'internal scratch']
  %s0 = inlined_call_operand.vmem [shape: f32[8,128], index: 0, kind: input, shape index: {}]
  %s1 = inlined_call_operand.vmem [shape: f32[520,288], index: 1, kind: input, shape index: {}]
  %s2 = inlined_call_operand.vmem [shape: f32[432,128], index: 2, kind: input, shape index: {}]
  %s3 = inlined_call_operand.vmem [shape: f32[8,128], index: 3, kind: output, shape index: {}]
  %s4 = sld [smem:[#allocation0]]
  $region22: #{net2_forward.1} parent=0
    _
  %s6 = ssub.s32 1, %s4
  %s7 = scalar_select 0, %s6, %s4
  // Predicated region
  $region2: #{net2_forward.1} parent=0 // pred_check
    _
  $region3: #{net2_forward.1} parent=0 // pred_check_branch
    %9 = sbr.rel (0) target = $region5
  $region4: #{net2_forward.1} parent=0 // pred_region
    _
  $region5: #{net2_forward.1} parent=0 // pred_fallthru
    _
  // Predicated region
  $region6: #{net2_forward.1} parent=0 // pred_check
    _
  $region7: #{net2_forward.1} parent=0 // pred_check_branch
    %11 = sbr.rel (0) target = $region9
  $region8: #{net2_forward.1} parent=0 // pred_region
    _
  $region9: #{net2_forward.1} parent=0 // pred_fallthru
    _
  // Predicated region
  $region10: #{net2_forward.1} parent=0 // pred_check
    _
  $region11: #{net2_forward.1} parent=0 // pred_check_branch
    %13 = sbr.rel (0) target = $region13
  $region12: #{net2_forward.1} parent=0 // pred_region
    _
  $region13: #{net2_forward.1} parent=0 // pred_fallthru
    _
  %v14 = vld [vmem:[%s0] sm:$0xff]
  %v15 = vld [vmem:[%s1] sm:$0xff]
  %v16 = vld [vmem:[%s1 + $0x8] sm:$0xff]
  %v17 = vld [vmem:[%s1 + $0x10] sm:$0xff]
  %v18 = vld [vmem:[%s1 + $0x18] sm:$0xff]
  %v19 = vld [vmem:[%s1 + $0x20] sm:$0xff]
  %v20 = vld [vmem:[%s1 + $0x28] sm:$0xff]
  %v21 = vld [vmem:[%s1 + $0x30] sm:$0xff]
  %v22 = vld [vmem:[%s1 + $0x38] sm:$0xff]
  %v23 = vld [vmem:[%s1 + $0x40] sm:$0xff]
  %v24 = vld [vmem:[%s1 + $0x48] sm:$0xff]
  %v25 = vld [vmem:[%s1 + $0x50] sm:$0xff]
  %v26 = vld [vmem:[%s1 + $0x58] sm:$0xff]
  %v27 = vld [vmem:[%s1 + $0x60] sm:$0xff]
  %v28 = vld [vmem:[%s1 + $0x68] sm:$0xff]
  %v29 = vld [vmem:[%s1 + $0x70] sm:$0xff]
  %v30 = vld [vmem:[%s1 + $0x78] sm:$0xff]
  %v31 = vld [vmem:[%s1 + $0x80] sm:$0xff]
  %v32 = vld [vmem:[%s1 + $0x88] sm:$0xff]
  %v33 = vld [vmem:[%s1 + $0x90] sm:$0xff]
  %v34 = vld [vmem:[%s1 + $0x98] sm:$0xff]
  %v35 = vld [vmem:[%s1 + $0xa0] sm:$0xff]
  %v36 = vld [vmem:[%s1 + $0xa8] sm:$0xff]
  %v37 = vld [vmem:[%s1 + $0xb0] sm:$0xff]
  %v38 = vld [vmem:[%s1 + $0xb8] sm:$0xff]
  %v39 = vld [vmem:[%s1 + $0xc0] sm:$0xff]
  %v40 = vld [vmem:[%s1 + $0xc8] sm:$0xff]
  %v41 = vld [vmem:[%s1 + $0xd0] sm:$0xff]
  %v42 = vld [vmem:[%s1 + $0xd8] sm:$0xff]
  %v43 = vld [vmem:[%s1 + $0xe0] sm:$0xff]
  %v44 = vld [vmem:[%s1 + $0xe8] sm:$0xff]
  %v45 = vld [vmem:[%s1 + $0xf0] sm:$0xff]
  %v46 = vld [vmem:[%s1 + $0xf8] sm:$0xff]
  %v47 = vld [vmem:[%s1 + $0x100] sm:$0xff]
  %v48 = vld [vmem:[%s1 + $0x108] sm:$0xff]
  %v49 = vld [vmem:[%s1 + $0x110] sm:$0xff]
  %v50 = vld [vmem:[%s1 + $0x118] sm:$0xff]
  %v51 = vld [vmem:[%s1 + $0x120] sm:$0xff]
  %v52 = vld [vmem:[%s1 + $0x128] sm:$0xff]
  %v53 = vld [vmem:[%s1 + $0x130] sm:$0xff]
  %v54 = vld [vmem:[%s1 + $0x138] sm:$0xff]
  %v55 = vld [vmem:[%s1 + $0x140] sm:$0xff]
  %v56 = vld [vmem:[%s1 + $0x148] sm:$0xff]
  %v57 = vld [vmem:[%s1 + $0x150] sm:$0xff]
  %v58 = vld [vmem:[%s1 + $0x158] sm:$0xff]
  %v59 = vld [vmem:[%s1 + $0x160] sm:$0xff]
  %v60 = vld [vmem:[%s1 + $0x168] sm:$0xff]
  %v61 = vld [vmem:[%s1 + $0x170] sm:$0xff]
  %v62 = vld [vmem:[%s1 + $0x178] sm:$0xff]
  %63 = vmatprep.subr.mxu0 %v16
  %64 = vmatpush1.msra.mxu0 %v15
  %65 = vmatprep.subr.mxu0 %v19
  %66 = vmatpush1.msra.mxu0 %v18
  %67 = vmatprep.subr.mxu0 %v22
  %68 = vmatpush1.msra.mxu0 %v21
  %69 = vmatprep.subr.mxu0 %v25
  %70 = vmatpush1.msra.mxu0 %v24
  %71 = vmatprep.subr.mxu0 %v28
  %72 = vmatpush1.msra.mxu0 %v27
  %73 = vmatprep.subr.mxu0 %v31
  %74 = vmatpush1.msra.mxu0 %v30
  %75 = vmatprep.subr.mxu0 %v34
  %76 = vmatpush1.msra.mxu0 %v33
  %77 = vmatprep.subr.mxu0 %v37
  %78 = vmatpush1.msra.mxu0 %v36
  %79 = vmatprep.subr.mxu0 %v40
  %80 = vmatpush1.msra.mxu0 %v39
  %81 = vmatprep.subr.mxu0 %v43
  %82 = vmatpush1.msra.mxu0 %v42
  %83 = vmatprep.subr.mxu0 %v46
  %84 = vmatpush1.msra.mxu0 %v45
  %85 = vmatprep.subr.mxu0 %v49
  %86 = vmatpush1.msra.mxu0 %v48
  %87 = vmatprep.subr.mxu0 %v52
  %88 = vmatpush1.msra.mxu0 %v51
  %89 = vmatprep.subr.mxu0 %v55
  %90 = vmatpush1.msra.mxu0 %v54
  %91 = vmatprep.subr.mxu0 %v58
  %92 = vmatpush1.msra.mxu0 %v57
  %93 = vmatprep.subr.mxu0 %v61
  %94 = vmatpush1.msra.mxu0 %v60
  %95 = vmatprep.subr.mxu0 0.0
  %96 = vmatpush1.msra.mxu0 0.0
  %97 = vmatprep.subr.mxu0 0.0
  %98 = vmatpush1.msra.mxu0 0.0
  %99 = vmatprep.subr.mxu0 0.0
  %100 = vmatpush1.msra.mxu0 0.0
  %101 = vmatprep.subr.mxu0 0.0
  %102 = vmatpush1.msra.mxu0 0.0
  %103 = vmatprep.subr.mxu0 0.0
  %104 = vmatpush1.msra.mxu0 0.0
  %105 = vmatprep.subr.mxu0 0.0
  %106 = vmatpush1.msra.mxu0 0.0
  %107 = vmatprep.subr.mxu0 0.0
  %108 = vmatpush1.msra.mxu0 0.0
  %109 = vmatprep.subr.mxu0 0.0
  %110 = vmatpush1.msra.mxu0 0.0
  %111 = vmatprep.subr.mxu0 0.0
  %112 = vmatpush1.msra.mxu0 0.0
  %113 = vmatprep.subr.mxu0 0.0
  %114 = vmatpush1.msra.mxu0 0.0
  %115 = vmatprep.subr.mxu0 0.0
  %116 = vmatpush1.msra.mxu0 0.0
  %117 = vmatprep.subr.mxu0 0.0
  %118 = vmatpush1.msra.mxu0 0.0
  %119 = vmatprep.subr.mxu0 0.0
  %120 = vmatpush1.msra.mxu0 0.0
  %121 = vmatprep.subr.mxu0 0.0
  %122 = vmatpush1.msra.mxu0 0.0
  %123 = vmatprep.subr.mxu0 0.0
  %124 = vmatpush1.msra.mxu0 0.0
  %125 = vmatprep.subr.mxu0 0.0
  %126 = vmatpush1.msra.mxu0 0.0
  %127 = vmatprep.mubr.f32.mxu0 0.0
  %128 = vmatmul.mubr.f32.gmra.mrb[0].mxu0 %v14
  %v129 = vpop.f32.mrb[0].mxu0
  %v130 = vadd.f32 0.0, %v129
  %v131 = vpop.f32.mrb[0].mxu0
  %v132 = vadd.f32 0.0, %v131
  %133 = vdwg.mxu0
  %134 = vmatprep.subr.mxu0 0.0
  %135 = vmatpush1.msra.mxu0 %v17
  %136 = vmatprep.subr.mxu0 0.0
  %137 = vmatpush1.msra.mxu0 %v20
  %138 = vmatprep.subr.mxu0 0.0
  %139 = vmatpush1.msra.mxu0 %v23
  %140 = vmatprep.subr.mxu0 0.0
  %141 = vmatpush1.msra.mxu0 %v26
  %142 = vmatprep.subr.mxu0 0.0
  %143 = vmatpush1.msra.mxu0 %v29
  %144 = vmatprep.subr.mxu0 0.0
  %145 = vmatpush1.msra.mxu0 %v32
  %146 = vmatprep.subr.mxu0 0.0
  %147 = vmatpush1.msra.mxu0 %v35
  %148 = vmatprep.subr.mxu0 0.0
  %149 = vmatpush1.msra.mxu0 %v38
  %150 = vmatprep.subr.mxu0 0.0
  %151 = vmatpush1.msra.mxu0 %v41
  %152 = vmatprep.subr.mxu0 0.0
  %153 = vmatpush1.msra.mxu0 %v44
  %154 = vmatprep.subr.mxu0 0.0
  %155 = vmatpush1.msra.mxu0 %v47
  %156 = vmatprep.subr.mxu0 0.0
  %157 = vmatpush1.msra.mxu0 %v50
  %158 = vmatprep.subr.mxu0 0.0
  %159 = vmatpush1.msra.mxu0 %v53
  %160 = vmatprep.subr.mxu0 0.0
  %161 = vmatpush1.msra.mxu0 %v56
  %162 = vmatprep.subr.mxu0 0.0
  %163 = vmatpush1.msra.mxu0 %v59
  %164 = vmatprep.subr.mxu0 0.0
  %165 = vmatpush1.msra.mxu0 %v62
  %166 = vmatprep.subr.mxu0 0.0
  %167 = vmatpush1.msra.mxu0 0.0
  %168 = vmatprep.subr.mxu0 0.0
  %169 = vmatpush1.msra.mxu0 0.0
  %170 = vmatprep.subr.mxu0 0.0
  %171 = vmatpush1.msra.mxu0 0.0
  %172 = vmatprep.subr.mxu0 0.0
  %173 = vmatpush1.msra.mxu0 0.0
  %174 = vmatprep.subr.mxu0 0.0
  %175 = vmatpush1.msra.mxu0 0.0
  %176 = vmatprep.subr.mxu0 0.0
  %177 = vmatpush1.msra.mxu0 0.0
  %178 = vmatprep.subr.mxu0 0.0
  %179 = vmatpush1.msra.mxu0 0.0
  %180 = vmatprep.subr.mxu0 0.0
  %181 = vmatpush1.msra.mxu0 0.0
  %182 = vmatprep.subr.mxu0 0.0
  %183 = vmatpush1.msra.mxu0 0.0
  %184 = vmatprep.subr.mxu0 0.0
  %185 = vmatpush1.msra.mxu0 0.0
  %186 = vmatprep.subr.mxu0 0.0
  %187 = vmatpush1.msra.mxu0 0.0
  %188 = vmatprep.subr.mxu0 0.0
  %189 = vmatpush1.msra.mxu0 0.0
  %190 = vmatprep.subr.mxu0 0.0
  %191 = vmatpush1.msra.mxu0 0.0
  %192 = vmatprep.subr.mxu0 0.0
  %193 = vmatpush1.msra.mxu0 0.0
  %194 = vmatprep.subr.mxu0 0.0
  %195 = vmatpush1.msra.mxu0 0.0
  %196 = vmatprep.subr.mxu0 0.0
  %197 = vmatpush1.msra.mxu0 0.0
  %198 = vmatprep.mubr.f32.mxu0 0.0
  %199 = vmatmul.mubr.f32.gmra.mrb[0].mxu0 %v14
  %v200 = vpop.f32.mrb[0].mxu0
  %v201 = vadd.f32 0.0, %v200
  %v202 = vpop.f32.mrb[0].mxu0
  %203 = vdwg.mxu0
  %v204 = vld [vmem:[%s1 + $0x180] sm:$0xff]
  %v205 = vld [vmem:[%s1 + $0x188] sm:$0xff]
  %v206 = vld [vmem:[%s1 + $0x190] sm:$0xff]
  %v207 = vld [vmem:[%s1 + $0x198] sm:$0xff]
  %v208 = vld [vmem:[%s1 + $0x1a0] sm:$0xff]
  %v209 = vld [vmem:[%s1 + $0x1a8] sm:$0xff]
  %v210 = vld [vmem:[%s1 + $0x1b0] sm:$0xff]
  %v211 = vld [vmem:[%s1 + $0x1b8] sm:$0xff]
  %v212 = vld [vmem:[%s1 + $0x1c0] sm:$0xff]
  %v213 = vld [vmem:[%s1 + $0x1c8] sm:$0xff]
  %v214 = vld [vmem:[%s1 + $0x1d0] sm:$0xff]
  %v215 = vld [vmem:[%s1 + $0x1d8] sm:$0xff]
  %v216 = vld [vmem:[%s1 + $0x1e0] sm:$0xff]
  %v217 = vld [vmem:[%s1 + $0x1e8] sm:$0xff]
  %v218 = vld [vmem:[%s1 + $0x1f0] sm:$0xff]
  %v219 = vld [vmem:[%s1 + $0x1f8] sm:$0xff]
  %v220 = vld [vmem:[%s1 + $0x200] sm:$0xff]
  %v221 = vld [vmem:[%s1 + $0x208] sm:$0xff]
  %v222 = vld [vmem:[%s1 + $0x210] sm:$0xff]
  %v223 = vld [vmem:[%s1 + $0x218] sm:$0xff]
  %v224 = vld [vmem:[%s1 + $0x220] sm:$0xff]
  %v225 = vld [vmem:[%s1 + $0x228] sm:$0xff]
  %v226 = vld [vmem:[%s1 + $0x230] sm:$0xff]
  %v227 = vld [vmem:[%s1 + $0x238] sm:$0xff]
  %v228 = vld [vmem:[%s1 + $0x240] sm:$0xff]
  %v229 = vld [vmem:[%s1 + $0x248] sm:$0xff]
  %v230 = vld [vmem:[%s1 + $0x250] sm:$0xff]
  %v231 = vld [vmem:[%s1 + $0x258] sm:$0xff]
  %v232 = vld [vmem:[%s1 + $0x260] sm:$0xff]
  %v233 = vld [vmem:[%s1 + $0x268] sm:$0xff]
  %v234 = vld [vmem:[%s1 + $0x270] sm:$0xff]
  %v235 = vld [vmem:[%s1 + $0x278] sm:$0xff]
  %v236 = vld [vmem:[%s1 + $0x280] sm:$0xff]
  %v237 = vld [vmem:[%s1 + $0x288] sm:$0xff]
  %v238 = vld [vmem:[%s1 + $0x290] sm:$0xff]
  %v239 = vld [vmem:[%s1 + $0x298] sm:$0xff]
  %v240 = vld [vmem:[%s1 + $0x2a0] sm:$0xff]
  %v241 = vld [vmem:[%s1 + $0x2a8] sm:$0xff]
  %v242 = vld [vmem:[%s1 + $0x2b0] sm:$0xff]
  %v243 = vld [vmem:[%s1 + $0x2b8] sm:$0xff]
  %v244 = vld [vmem:[%s1 + $0x2c0] sm:$0xff]
  %v245 = vld [vmem:[%s1 + $0x2c8] sm:$0xff]
  %v246 = vld [vmem:[%s1 + $0x2d0] sm:$0xff]
  %v247 = vld [vmem:[%s1 + $0x2d8] sm:$0xff]
  %v248 = vld [vmem:[%s1 + $0x2e0] sm:$0xff]
  %v249 = vld [vmem:[%s1 + $0x2e8] sm:$0xff]
  %v250 = vld [vmem:[%s1 + $0x2f0] sm:$0xff]
  %v251 = vld [vmem:[%s1 + $0x2f8] sm:$0xff]
  %252 = vmatprep.subr.mxu0 %v205
  %253 = vmatpush1.msra.mxu0 %v204
  %254 = vmatprep.subr.mxu0 %v208
  %255 = vmatpush1.msra.mxu0 %v207
  %256 = vmatprep.subr.mxu0 %v211
  %257 = vmatpush1.msra.mxu0 %v210
  %258 = vmatprep.subr.mxu0 %v214
  %259 = vmatpush1.msra.mxu0 %v213
  %260 = vmatprep.subr.mxu0 %v217
  %261 = vmatpush1.msra.mxu0 %v216
  %262 = vmatprep.subr.mxu0 %v220
  %263 = vmatpush1.msra.mxu0 %v219
  %264 = vmatprep.subr.mxu0 %v223
  %265 = vmatpush1.msra.mxu0 %v222
  %266 = vmatprep.subr.mxu0 %v226
  %267 = vmatpush1.msra.mxu0 %v225
  %268 = vmatprep.subr.mxu0 %v229
  %269 = vmatpush1.msra.mxu0 %v228
  %270 = vmatprep.subr.mxu0 %v232
  %271 = vmatpush1.msra.mxu0 %v231
  %272 = vmatprep.subr.mxu0 %v235
  %273 = vmatpush1.msra.mxu0 %v234
  %274 = vmatprep.subr.mxu0 %v238
  %275 = vmatpush1.msra.mxu0 %v237
  %276 = vmatprep.subr.mxu0 %v241
  %277 = vmatpush1.msra.mxu0 %v240
  %278 = vmatprep.subr.mxu0 %v244
  %279 = vmatpush1.msra.mxu0 %v243
  %280 = vmatprep.subr.mxu0 %v247
  %281 = vmatpush1.msra.mxu0 %v246
  %282 = vmatprep.subr.mxu0 %v250
  %283 = vmatpush1.msra.mxu0 %v249
  %284 = vmatprep.subr.mxu0 0.0
  %285 = vmatpush1.msra.mxu0 0.0
  %286 = vmatprep.subr.mxu0 0.0
  %287 = vmatpush1.msra.mxu0 0.0
  %288 = vmatprep.subr.mxu0 0.0
  %289 = vmatpush1.msra.mxu0 0.0
  %290 = vmatprep.subr.mxu0 0.0
  %291 = vmatpush1.msra.mxu0 0.0
  %292 = vmatprep.subr.mxu0 0.0
  %293 = vmatpush1.msra.mxu0 0.0
  %294 = vmatprep.subr.mxu0 0.0
  %295 = vmatpush1.msra.mxu0 0.0
  %296 = vmatprep.subr.mxu0 0.0
  %297 = vmatpush1.msra.mxu0 0.0
  %298 = vmatprep.subr.mxu0 0.0
  %299 = vmatpush1.msra.mxu0 0.0
  %300 = vmatprep.subr.mxu0 0.0
  %301 = vmatpush1.msra.mxu0 0.0
  %302 = vmatprep.subr.mxu0 0.0
  %303 = vmatpush1.msra.mxu0 0.0
  %304 = vmatprep.subr.mxu0 0.0
  %305 = vmatpush1.msra.mxu0 0.0
  %306 = vmatprep.subr.mxu0 0.0
  %307 = vmatpush1.msra.mxu0 0.0
  %308 = vmatprep.subr.mxu0 0.0
  %309 = vmatpush1.msra.mxu0 0.0
  %310 = vmatprep.subr.mxu0 0.0
  %311 = vmatpush1.msra.mxu0 0.0
  %312 = vmatprep.subr.mxu0 0.0
  %313 = vmatpush1.msra.mxu0 0.0
  %314 = vmatprep.subr.mxu0 0.0
  %315 = vmatpush1.msra.mxu0 0.0
  %316 = vmatprep.mubr.f32.mxu0 0.0
  %317 = vmatmul.mubr.f32.gmra.mrb[0].mxu0 %v14
  %v318 = vpop.f32.mrb[0].mxu0
  %v319 = vadd.f32 0.0, %v318
  %v320 = vpop.f32.mrb[0].mxu0
  %v321 = vadd.f32 0.0, %v320
  %322 = vdwg.mxu0
  %323 = vmatprep.subr.mxu0 0.0
  %324 = vmatpush1.msra.mxu0 %v206
  %325 = vmatprep.subr.mxu0 0.0
  %326 = vmatpush1.msra.mxu0 %v209
  %327 = vmatprep.subr.mxu0 0.0
  %328 = vmatpush1.msra.mxu0 %v212
  %329 = vmatprep.subr.mxu0 0.0
  %330 = vmatpush1.msra.mxu0 %v215
  %331 = vmatprep.subr.mxu0 0.0
  %332 = vmatpush1.msra.mxu0 %v218
  %333 = vmatprep.subr.mxu0 0.0
  %334 = vmatpush1.msra.mxu0 %v221
  %335 = vmatprep.subr.mxu0 0.0
  %336 = vmatpush1.msra.mxu0 %v224
  %337 = vmatprep.subr.mxu0 0.0
  %338 = vmatpush1.msra.mxu0 %v227
  %339 = vmatprep.subr.mxu0 0.0
  %340 = vmatpush1.msra.mxu0 %v230
  %341 = vmatprep.subr.mxu0 0.0
  %342 = vmatpush1.msra.mxu0 %v233
  %343 = vmatprep.subr.mxu0 0.0
  %344 = vmatpush1.msra.mxu0 %v236
  %345 = vmatprep.subr.mxu0 0.0
  %346 = vmatpush1.msra.mxu0 %v239
  %347 = vmatprep.subr.mxu0 0.0
  %348 = vmatpush1.msra.mxu0 %v242
  %349 = vmatprep.subr.mxu0 0.0
  %350 = vmatpush1.msra.mxu0 %v245
  %351 = vmatprep.subr.mxu0 0.0
  %352 = vmatpush1.msra.mxu0 %v248
  %353 = vmatprep.subr.mxu0 0.0
  %354 = vmatpush1.msra.mxu0 %v251
  %355 = vmatprep.subr.mxu0 0.0
  %356 = vmatpush1.msra.mxu0 0.0
  %357 = vmatprep.subr.mxu0 0.0
  %358 = vmatpush1.msra.mxu0 0.0
  %359 = vmatprep.subr.mxu0 0.0
  %360 = vmatpush1.msra.mxu0 0.0
  %361 = vmatprep.subr.mxu0 0.0
  %362 = vmatpush1.msra.mxu0 0.0
  %363 = vmatprep.subr.mxu0 0.0
  %364 = vmatpush1.msra.mxu0 0.0
  %365 = vmatprep.subr.mxu0 0.0
  %366 = vmatpush1.msra.mxu0 0.0
  %367 = vmatprep.subr.mxu0 0.0
  %368 = vmatpush1.msra.mxu0 0.0
  %369 = vmatprep.subr.mxu0 0.0
  %370 = vmatpush1.msra.mxu0 0.0
  %371 = vmatprep.subr.mxu0 0.0
  %372 = vmatpush1.msra.mxu0 0.0
  %373 = vmatprep.subr.mxu0 0.0
  %374 = vmatpush1.msra.mxu0 0.0
  %375 = vmatprep.subr.mxu0 0.0
  %376 = vmatpush1.msra.mxu0 0.0
  %377 = vmatprep.subr.mxu0 0.0
  %378 = vmatpush1.msra.mxu0 0.0
  %379 = vmatprep.subr.mxu0 0.0
  %380 = vmatpush1.msra.mxu0 0.0
  %381 = vmatprep.subr.mxu0 0.0
  %382 = vmatpush1.msra.mxu0 0.0
  %383 = vmatprep.subr.mxu0 0.0
  %384 = vmatpush1.msra.mxu0 0.0
  %385 = vmatprep.subr.mxu0 0.0
  %386 = vmatpush1.msra.mxu0 0.0
  %387 = vmatprep.mubr.f32.mxu0 0.0
  %388 = vmatmul.mubr.f32.gmra.mrb[0].mxu0 %v14
  %v389 = vpop.f32.mrb[0].mxu0
  %v390 = vadd.f32 0.0, %v389
  %v391 = vpop.f32.mrb[0].mxu0
  %392 = vdwg.mxu0
  %v393 = vmax.f32 %v130, %v319
  %v394 = vmax.f32 %v132, %v321
  %v395 = vmax.f32 %v201, %v390
  %v396 = vld [vmem:[%s1 + $0x300] sm:$0xff]
  %v397 = vld [vmem:[%s1 + $0x308] sm:$0xff]
  %v398 = vld [vmem:[%s1 + $0x310] sm:$0xff]
  %v399 = vld [vmem:[%s1 + $0x318] sm:$0xff]
  %v400 = vld [vmem:[%s1 + $0x320] sm:$0xff]
  %v401 = vld [vmem:[%s1 + $0x328] sm:$0xff]
  %v402 = vld [vmem:[%s1 + $0x330] sm:$0xff]
  %v403 = vld [vmem:[%s1 + $0x338] sm:$0xff]
  %v404 = vld [vmem:[%s1 + $0x340] sm:$0xff]
  %v405 = vld [vmem:[%s1 + $0x348] sm:$0xff]
  %v406 = vld [vmem:[%s1 + $0x350] sm:$0xff]
  %v407 = vld [vmem:[%s1 + $0x358] sm:$0xff]
  %v408 = vld [vmem:[%s1 + $0x360] sm:$0xff]
  %v409 = vld [vmem:[%s1 + $0x368] sm:$0xff]
  %v410 = vld [vmem:[%s1 + $0x370] sm:$0xff]
  %v411 = vld [vmem:[%s1 + $0x378] sm:$0xff]
  %v412 = vld [vmem:[%s1 + $0x380] sm:$0xff]
  %v413 = vld [vmem:[%s1 + $0x388] sm:$0xff]
  %v414 = vld [vmem:[%s1 + $0x390] sm:$0xff]
  %v415 = vld [vmem:[%s1 + $0x398] sm:$0xff]
  %v416 = vld [vmem:[%s1 + $0x3a0] sm:$0xff]
  %v417 = vld [vmem:[%s1 + $0x3a8] sm:$0xff]
  %v418 = vld [vmem:[%s1 + $0x3b0] sm:$0xff]
  %v419 = vld [vmem:[%s1 + $0x3b8] sm:$0xff]
  %v420 = vld [vmem:[%s1 + $0x3c0] sm:$0xff]
  %v421 = vld [vmem:[%s1 + $0x3c8] sm:$0xff]
  %v422 = vld [vmem:[%s1 + $0x3d0] sm:$0xff]
  %v423 = vld [vmem:[%s1 + $0x3d8] sm:$0xff]
  %v424 = vld [vmem:[%s1 + $0x3e0] sm:$0xff]
  %v425 = vld [vmem:[%s1 + $0x3e8] sm:$0xff]
  %v426 = vld [vmem:[%s1 + $0x3f0] sm:$0xff]
  %v427 = vld [vmem:[%s1 + $0x3f8] sm:$0xff]
  %v428 = vld [vmem:[%s1 + $0x400] sm:$0xff]
  %v429 = vld [vmem:[%s1 + $0x408] sm:$0xff]
  %v430 = vld [vmem:[%s1 + $0x410] sm:$0xff]
  %v431 = vld [vmem:[%s1 + $0x418] sm:$0xff]
  %v432 = vld [vmem:[%s1 + $0x420] sm:$0xff]
  %v433 = vld [vmem:[%s1 + $0x428] sm:$0xff]
  %v434 = vld [vmem:[%s1 + $0x430] sm:$0xff]
  %v435 = vld [vmem:[%s1 + $0x438] sm:$0xff]
  %v436 = vld [vmem:[%s1 + $0x440] sm:$0xff]
  %v437 = vld [vmem:[%s1 + $0x448] sm:$0xff]
  %v438 = vld [vmem:[%s1 + $0x450] sm:$0xff]
  %v439 = vld [vmem:[%s1 + $0x458] sm:$0xff]
  %v440 = vld [vmem:[%s1 + $0x460] sm:$0xff]
  %v441 = vld [vmem:[%s1 + $0x468] sm:$0xff]
  %v442 = vld [vmem:[%s1 + $0x470] sm:$0xff]
  %v443 = vld [vmem:[%s1 + $0x478] sm:$0xff]
  %444 = vmatprep.subr.mxu0 %v397
  %445 = vmatpush1.msra.mxu0 %v396
  %446 = vmatprep.subr.mxu0 %v400
  %447 = vmatpush1.msra.mxu0 %v399
  %448 = vmatprep.subr.mxu0 %v403
  %449 = vmatpush1.msra.mxu0 %v402
  %450 = vmatprep.subr.mxu0 %v406
  %451 = vmatpush1.msra.mxu0 %v405
  %452 = vmatprep.subr.mxu0 %v409
  %453 = vmatpush1.msra.mxu0 %v408
  %454 = vmatprep.subr.mxu0 %v412
  %455 = vmatpush1.msra.mxu0 %v411
  %456 = vmatprep.subr.mxu0 %v415
  %457 = vmatpush1.msra.mxu0 %v414
  %458 = vmatprep.subr.mxu0 %v418
  %459 = vmatpush1.msra.mxu0 %v417
  %460 = vmatprep.subr.mxu0 %v421
  %461 = vmatpush1.msra.mxu0 %v420
  %462 = vmatprep.subr.mxu0 %v424
  %463 = vmatpush1.msra.mxu0 %v423
  %464 = vmatprep.subr.mxu0 %v427
  %465 = vmatpush1.msra.mxu0 %v426
  %466 = vmatprep.subr.mxu0 %v430
  %467 = vmatpush1.msra.mxu0 %v429
  %468 = vmatprep.subr.mxu0 %v433
  %469 = vmatpush1.msra.mxu0 %v432
  %470 = vmatprep.subr.mxu0 %v436
  %471 = vmatpush1.msra.mxu0 %v435
  %472 = vmatprep.subr.mxu0 %v439
  %473 = vmatpush1.msra.mxu0 %v438
  %474 = vmatprep.subr.mxu0 %v442
  %475 = vmatpush1.msra.mxu0 %v441
  %476 = vmatprep.subr.mxu0 0.0
  %477 = vmatpush1.msra.mxu0 0.0
  %478 = vmatprep.subr.mxu0 0.0
  %479 = vmatpush1.msra.mxu0 0.0
  %480 = vmatprep.subr.mxu0 0.0
  %481 = vmatpush1.msra.mxu0 0.0
  %482 = vmatprep.subr.mxu0 0.0
  %483 = vmatpush1.msra.mxu0 0.0
  %484 = vmatprep.subr.mxu0 0.0
  %485 = vmatpush1.msra.mxu0 0.0
  %486 = vmatprep.subr.mxu0 0.0
  %487 = vmatpush1.msra.mxu0 0.0
  %488 = vmatprep.subr.mxu0 0.0
  %489 = vmatpush1.msra.mxu0 0.0
  %490 = vmatprep.subr.mxu0 0.0
  %491 = vmatpush1.msra.mxu0 0.0
  %492 = vmatprep.subr.mxu0 0.0
  %493 = vmatpush1.msra.mxu0 0.0
  %494 = vmatprep.subr.mxu0 0.0
  %495 = vmatpush1.msra.mxu0 0.0
  %496 = vmatprep.subr.mxu0 0.0
  %497 = vmatpush1.msra.mxu0 0.0
  %498 = vmatprep.subr.mxu0 0.0
  %499 = vmatpush1.msra.mxu0 0.0
  %500 = vmatprep.subr.mxu0 0.0
  %501 = vmatpush1.msra.mxu0 0.0
  %502 = vmatprep.subr.mxu0 0.0
  %503 = vmatpush1.msra.mxu0 0.0
  %504 = vmatprep.subr.mxu0 0.0
  %505 = vmatpush1.msra.mxu0 0.0
  %506 = vmatprep.subr.mxu0 0.0
  %507 = vmatpush1.msra.mxu0 0.0
  %508 = vmatprep.mubr.f32.mxu0 0.0
  %509 = vmatmul.mubr.f32.gmra.mrb[0].mxu0 %v14
  %v510 = vpop.f32.mrb[0].mxu0
  %v511 = vadd.f32 0.0, %v510
  %v512 = vpop.f32.mrb[0].mxu0
  %v513 = vadd.f32 0.0, %v512
  %514 = vdwg.mxu0
  %515 = vmatprep.subr.mxu0 0.0
  %516 = vmatpush1.msra.mxu0 %v398
  %517 = vmatprep.subr.mxu0 0.0
  %518 = vmatpush1.msra.mxu0 %v401
  %519 = vmatprep.subr.mxu0 0.0
  %520 = vmatpush1.msra.mxu0 %v404
  %521 = vmatprep.subr.mxu0 0.0
  %522 = vmatpush1.msra.mxu0 %v407
  %523 = vmatprep.subr.mxu0 0.0
  %524 = vmatpush1.msra.mxu0 %v410
  %525 = vmatprep.subr.mxu0 0.0
  %526 = vmatpush1.msra.mxu0 %v413
  %527 = vmatprep.subr.mxu0 0.0
  %528 = vmatpush1.msra.mxu0 %v416
  %529 = vmatprep.subr.mxu0 0.0
  %530 = vmatpush1.msra.mxu0 %v419
  %531 = vmatprep.subr.mxu0 0.0
  %532 = vmatpush1.msra.mxu0 %v422
  %533 = vmatprep.subr.mxu0 0.0
  %534 = vmatpush1.msra.mxu0 %v425
  %535 = vmatprep.subr.mxu0 0.0
  %536 = vmatpush1.msra.mxu0 %v428
  %537 = vmatprep.subr.mxu0 0.0
  %538 = vmatpush1.msra.mxu0 %v431
  %539 = vmatprep.subr.mxu0 0.0
  %540 = vmatpush1.msra.mxu0 %v434
  %541 = vmatprep.subr.mxu0 0.0
  %542 = vmatpush1.msra.mxu0 %v437
  %543 = vmatprep.subr.mxu0 0.0
  %544 = vmatpush1.msra.mxu0 %v440
  %545 = vmatprep.subr.mxu0 0.0
  %546 = vmatpush1.msra.mxu0 %v443
  %547 = vmatprep.subr.mxu0 0.0
  %548 = vmatpush1.msra.mxu0 0.0
  %549 = vmatprep.subr.mxu0 0.0
  %550 = vmatpush1.msra.mxu0 0.0
  %551 = vmatprep.subr.mxu0 0.0
  %552 = vmatpush1.msra.mxu0 0.0
  %553 = vmatprep.subr.mxu0 0.0
  %554 = vmatpush1.msra.mxu0 0.0
  %555 = vmatprep.subr.mxu0 0.0
  %556 = vmatpush1.msra.mxu0 0.0
  %557 = vmatprep.subr.mxu0 0.0
  %558 = vmatpush1.msra.mxu0 0.0
  %559 = vmatprep.subr.mxu0 0.0
  %560 = vmatpush1.msra.mxu0 0.0
  %561 = vmatprep.subr.mxu0 0.0
  %562 = vmatpush1.msra.mxu0 0.0
  %563 = vmatprep.subr.mxu0 0.0
  %564 = vmatpush1.msra.mxu0 0.0
  %565 = vmatprep.subr.mxu0 0.0
  %566 = vmatpush1.msra.mxu0 0.0
  %567 = vmatprep.subr.mxu0 0.0
  %568 = vmatpush1.msra.mxu0 0.0
  %569 = vmatprep.subr.mxu0 0.0
  %570 = vmatpush1.msra.mxu0 0.0
  %571 = vmatprep.subr.mxu0 0.0
  %572 = vmatpush1.msra.mxu0 0.0
  %573 = vmatprep.subr.mxu0 0.0
  %574 = vmatpush1.msra.mxu0 0.0
  %575 = vmatprep.subr.mxu0 0.0
  %576 = vmatpush1.msra.mxu0 0.0
  %577 = vmatprep.subr.mxu0 0.0
  %578 = vmatpush1.msra.mxu0 0.0
  %579 = vmatprep.mubr.f32.mxu0 0.0
  %580 = vmatmul.mubr.f32.gmra.mrb[0].mxu0 %v14
  %v581 = vpop.f32.mrb[0].mxu0
  %v582 = vadd.f32 0.0, %v581
  %v583 = vpop.f32.mrb[0].mxu0
  %584 = vdwg.mxu0
  %v585 = vld [vmem:[%s1 + $0x480] sm:$0xff]
  %v586 = vld [vmem:[%s1 + $0x488] sm:$0xff]
  %v587 = vld [vmem:[%s1 + $0x490] sm:$0xff]
  %v588 = vld [vmem:[%s1 + $0x498] sm:$0xff]
  %v589 = vld [vmem:[%s1 + $0x4a0] sm:$0xff]
  %v590 = vld [vmem:[%s1 + $0x4a8] sm:$0xff]
  %v591 = vld [vmem:[%s1 + $0x4b0] sm:$0xff]
  %v592 = vld [vmem:[%s1 + $0x4b8] sm:$0xff]
  %v593 = vld [vmem:[%s1 + $0x4c0] sm:$0xff]
  %v594 = vld [vmem:[%s1 + $0x4c8] sm:$0xff]
  %v595 = vld [vmem:[%s1 + $0x4d0] sm:$0xff]
  %v596 = vld [vmem:[%s1 + $0x4d8] sm:$0xff]
  %v597 = vld [vmem:[%s1 + $0x4e0] sm:$0xff]
  %v598 = vld [vmem:[%s1 + $0x4e8] sm:$0xff]
  %v599 = vld [vmem:[%s1 + $0x4f0] sm:$0xff]
  %v600 = vld [vmem:[%s1 + $0x4f8] sm:$0xff]
  %v601 = vld [vmem:[%s1 + $0x500] sm:$0xff]
  %v602 = vld [vmem:[%s1 + $0x508] sm:$0xff]
  %v603 = vld [vmem:[%s1 + $0x510] sm:$0xff]
  %v604 = vld [vmem:[%s1 + $0x518] sm:$0xff]
  %v605 = vld [vmem:[%s1 + $0x520] sm:$0xff]
  %v606 = vld [vmem:[%s1 + $0x528] sm:$0xff]
  %v607 = vld [vmem:[%s1 + $0x530] sm:$0xff]
  %v608 = vld [vmem:[%s1 + $0x538] sm:$0xff]
  %v609 = vld [vmem:[%s1 + $0x540] sm:$0xff]
  %v610 = vld [vmem:[%s1 + $0x548] sm:$0xff]
  %v611 = vld [vmem:[%s1 + $0x550] sm:$0xff]
  %v612 = vld [vmem:[%s1 + $0x558] sm:$0xff]
  %v613 = vld [vmem:[%s1 + $0x560] sm:$0xff]
  %v614 = vld [vmem:[%s1 + $0x568] sm:$0xff]
  %v615 = vld [vmem:[%s1 + $0x570] sm:$0xff]
  %v616 = vld [vmem:[%s1 + $0x578] sm:$0xff]
  %v617 = vld [vmem:[%s1 + $0x580] sm:$0xff]
  %v618 = vld [vmem:[%s1 + $0x588] sm:$0xff]
  %v619 = vld [vmem:[%s1 + $0x590] sm:$0xff]
  %v620 = vld [vmem:[%s1 + $0x598] sm:$0xff]
  %v621 = vld [vmem:[%s1 + $0x5a0] sm:$0xff]
  %v622 = vld [vmem:[%s1 + $0x5a8] sm:$0xff]
  %v623 = vld [vmem:[%s1 + $0x5b0] sm:$0xff]
  %v624 = vld [vmem:[%s1 + $0x5b8] sm:$0xff]
  %v625 = vld [vmem:[%s1 + $0x5c0] sm:$0xff]
  %v626 = vld [vmem:[%s1 + $0x5c8] sm:$0xff]
  %v627 = vld [vmem:[%s1 + $0x5d0] sm:$0xff]
  %v628 = vld [vmem:[%s1 + $0x5d8] sm:$0xff]
  %v629 = vld [vmem:[%s1 + $0x5e0] sm:$0xff]
  %v630 = vld [vmem:[%s1 + $0x5e8] sm:$0xff]
  %v631 = vld [vmem:[%s1 + $0x5f0] sm:$0xff]
  %v632 = vld [vmem:[%s1 + $0x5f8] sm:$0xff]
  %633 = vmatprep.subr.mxu0 %v586
  %634 = vmatpush1.msra.mxu0 %v585
  %635 = vmatprep.subr.mxu0 %v589
  %636 = vmatpush1.msra.mxu0 %v588
  %637 = vmatprep.subr.mxu0 %v592
  %638 = vmatpush1.msra.mxu0 %v591
  %639 = vmatprep.subr.mxu0 %v595
  %640 = vmatpush1.msra.mxu0 %v594
  %641 = vmatprep.subr.mxu0 %v598
  %642 = vmatpush1.msra.mxu0 %v597
  %643 = vmatprep.subr.mxu0 %v601
  %644 = vmatpush1.msra.mxu0 %v600
  %645 = vmatprep.subr.mxu0 %v604
  %646 = vmatpush1.msra.mxu0 %v603
  %647 = vmatprep.subr.mxu0 %v607
  %648 = vmatpush1.msra.mxu0 %v606
  %649 = vmatprep.subr.mxu0 %v610
  %650 = vmatpush1.msra.mxu0 %v609
  %651 = vmatprep.subr.mxu0 %v613
  %652 = vmatpush1.msra.mxu0 %v612
  %653 = vmatprep.subr.mxu0 %v616
  %654 = vmatpush1.msra.mxu0 %v615
  %655 = vmatprep.subr.mxu0 %v619
  %656 = vmatpush1.msra.mxu0 %v618
  %657 = vmatprep.subr.mxu0 %v622
  %658 = vmatpush1.msra.mxu0 %v621
  %659 = vmatprep.subr.mxu0 %v625
  %660 = vmatpush1.msra.mxu0 %v624
  %661 = vmatprep.subr.mxu0 %v628
  %662 = vmatpush1.msra.mxu0 %v627
  %663 = vmatprep.subr.mxu0 %v631
  %664 = vmatpush1.msra.mxu0 %v630
  %665 = vmatprep.subr.mxu0 0.0
  %666 = vmatpush1.msra.mxu0 0.0
  %667 = vmatprep.subr.mxu0 0.0
  %668 = vmatpush1.msra.mxu0 0.0
  %669 = vmatprep.subr.mxu0 0.0
  %670 = vmatpush1.msra.mxu0 0.0
  %671 = vmatprep.subr.mxu0 0.0
  %672 = vmatpush1.msra.mxu0 0.0
  %673 = vmatprep.subr.mxu0 0.0
  %674 = vmatpush1.msra.mxu0 0.0
  %675 = vmatprep.subr.mxu0 0.0
  %676 = vmatpush1.msra.mxu0 0.0
  %677 = vmatprep.subr.mxu0 0.0
  %678 = vmatpush1.msra.mxu0 0.0
  %679 = vmatprep.subr.mxu0 0.0
  %680 = vmatpush1.msra.mxu0 0.0
  %681 = vmatprep.subr.mxu0 0.0
  %682 = vmatpush1.msra.mxu0 0.0
  %683 = vmatprep.subr.mxu0 0.0
  %684 = vmatpush1.msra.mxu0 0.0
  %685 = vmatprep.subr.mxu0 0.0
  %686 = vmatpush1.msra.mxu0 0.0
  %687 = vmatprep.subr.mxu0 0.0
  %688 = vmatpush1.msra.mxu0 0.0
  %689 = vmatprep.subr.mxu0 0.0
  %690 = vmatpush1.msra.mxu0 0.0
  %691 = vmatprep.subr.mxu0 0.0
  %692 = vmatpush1.msra.mxu0 0.0
  %693 = vmatprep.subr.mxu0 0.0
  %694 = vmatpush1.msra.mxu0 0.0
  %695 = vmatprep.subr.mxu0 0.0
  %696 = vmatpush1.msra.mxu0 0.0
  %697 = vmatprep.mubr.f32.mxu0 0.0
  %698 = vmatmul.mubr.f32.gmra.mrb[0].mxu0 %v14
  %v699 = vpop.f32.mrb[0].mxu0
  %v700 = vadd.f32 0.0, %v699
  %v701 = vpop.f32.mrb[0].mxu0
  %v702 = vadd.f32 0.0, %v701
  %703 = vdwg.mxu0
  %704 = vmatprep.subr.mxu0 0.0
  %705 = vmatpush1.msra.mxu0 %v587
  %706 = vmatprep.subr.mxu0 0.0
  %707 = vmatpush1.msra.mxu0 %v590
  %708 = vmatprep.subr.mxu0 0.0
  %709 = vmatpush1.msra.mxu0 %v593
  %710 = vmatprep.subr.mxu0 0.0
  %711 = vmatpush1.msra.mxu0 %v596
  %712 = vmatprep.subr.mxu0 0.0
  %713 = vmatpush1.msra.mxu0 %v599
  %714 = vmatprep.subr.mxu0 0.0
  %715 = vmatpush1.msra.mxu0 %v602
  %716 = vmatprep.subr.mxu0 0.0
  %717 = vmatpush1.msra.mxu0 %v605
  %718 = vmatprep.subr.mxu0 0.0
  %719 = vmatpush1.msra.mxu0 %v608
  %720 = vmatprep.subr.mxu0 0.0
  %721 = vmatpush1.msra.mxu0 %v611
  %722 = vmatprep.subr.mxu0 0.0
  %723 = vmatpush1.msra.mxu0 %v614
  %724 = vmatprep.subr.mxu0 0.0
  %725 = vmatpush1.msra.mxu0 %v617
  %726 = vmatprep.subr.mxu0 0.0
  %727 = vmatpush1.msra.mxu0 %v620
  %728 = vmatprep.subr.mxu0 0.0
  %729 = vmatpush1.msra.mxu0 %v623
  %730 = vmatprep.subr.mxu0 0.0
  %731 = vmatpush1.msra.mxu0 %v626
  %732 = vmatprep.subr.mxu0 0.0
  %733 = vmatpush1.msra.mxu0 %v629
  %734 = vmatprep.subr.mxu0 0.0
  %735 = vmatpush1.msra.mxu0 %v632
  %736 = vmatprep.subr.mxu0 0.0
  %737 = vmatpush1.msra.mxu0 0.0
  %738 = vmatprep.subr.mxu0 0.0
  %739 = vmatpush1.msra.mxu0 0.0
  %740 = vmatprep.subr.mxu0 0.0
  %741 = vmatpush1.msra.mxu0 0.0
  %742 = vmatprep.subr.mxu0 0.0
  %743 = vmatpush1.msra.mxu0 0.0
  %744 = vmatprep.subr.mxu0 0.0
  %745 = vmatpush1.msra.mxu0 0.0
  %746 = vmatprep.subr.mxu0 0.0
  %747 = vmatpush1.msra.mxu0 0.0
  %748 = vmatprep.subr.mxu0 0.0
  %749 = vmatpush1.msra.mxu0 0.0
  %750 = vmatprep.subr.mxu0 0.0
  %751 = vmatpush1.msra.mxu0 0.0
  %752 = vmatprep.subr.mxu0 0.0
  %753 = vmatpush1.msra.mxu0 0.0
  %754 = vmatprep.subr.mxu0 0.0
  %755 = vmatpush1.msra.mxu0 0.0
  %756 = vmatprep.subr.mxu0 0.0
  %757 = vmatpush1.msra.mxu0 0.0
  %758 = vmatprep.subr.mxu0 0.0
  %759 = vmatpush1.msra.mxu0 0.0
  %760 = vmatprep.subr.mxu0 0.0
  %761 = vmatpush1.msra.mxu0 0.0
  %762 = vmatprep.subr.mxu0 0.0
  %763 = vmatpush1.msra.mxu0 0.0
  %764 = vmatprep.subr.mxu0 0.0
  %765 = vmatpush1.msra.mxu0 0.0
  %766 = vmatprep.subr.mxu0 0.0
  %767 = vmatpush1.msra.mxu0 0.0
  %768 = vmatprep.mubr.f32.mxu0 0.0
  %769 = vmatmul.mubr.f32.gmra.mrb[0].mxu0 %v14
  %v770 = vpop.f32.mrb[0].mxu0
  %v771 = vadd.f32 0.0, %v770
  %v772 = vpop.f32.mrb[0].mxu0
  %773 = vdwg.mxu0
  %v774 = vmax.f32 %v511, %v700
  %v775 = vmax.f32 %v513, %v702
  %v776 = vmax.f32 %v582, %v771
  %v777 = vmax.f32 %v393, %v774
  %v778 = vmax.f32 %v394, %v775
  %v779 = vmax.f32 %v395, %v776
  %s780 = scalar_lea.vmem %s1, 1536
  %v781 = vld [vmem:[%s780] ss:$8 sm:$0x7]
  %v783 = vlaneseq
  %v784 = vshrl.u32 %v783, 7
  %v785 = vsub.s32 0, %v784
  %v786 = vrot.slane %v781, %v785
  %v787 = vlaneseq
  %v788 = vshrl.u32 %v787, 7
  %v789 = vsub.s32 1, %v788
  %v790 = vrot.slane %v781, %v789
  %v791 = vlaneseq
  %v792 = vshrl.u32 %v791, 7
  %v793 = vsub.s32 2, %v792
  %v794 = vrot.slane %v781, %v793
  %v798 = vadd.f32 %v777, %v786
  %v799 = vadd.f32 %v778, %v790
  %v800 = vadd.f32 %v779, %v794
  %v801 = vmax.f32 %v798, 0.0
  %v802 = vmax.f32 %v799, 0.0
  %v803 = vmax.f32 %v800, 0.0
  %v804 = vld [vmem:[%s2] sm:$0xff]
  %v805 = vld [vmem:[%s2 + $0x8] sm:$0xff]
  %v806 = vld [vmem:[%s2 + $0x10] sm:$0xff]
  %v807 = vld [vmem:[%s2 + $0x18] sm:$0xff]
  %v808 = vld [vmem:[%s2 + $0x20] sm:$0xff]
  %v809 = vld [vmem:[%s2 + $0x28] sm:$0xff]
  %v810 = vld [vmem:[%s2 + $0x30] sm:$0xff]
  %v811 = vld [vmem:[%s2 + $0x38] sm:$0xff]
  %v812 = vld [vmem:[%s2 + $0x40] sm:$0xff]
  %v813 = vld [vmem:[%s2 + $0x48] sm:$0xff]
  %v814 = vld [vmem:[%s2 + $0x50] sm:$0xff]
  %v815 = vld [vmem:[%s2 + $0x58] sm:$0xff]
  %v816 = vld [vmem:[%s2 + $0x60] sm:$0xff]
  %v817 = vld [vmem:[%s2 + $0x68] sm:$0xff]
  %v818 = vld [vmem:[%s2 + $0x70] sm:$0xff]
  %v819 = vld [vmem:[%s2 + $0x78] sm:$0xff]
  %v820 = vld [vmem:[%s2 + $0x80] sm:$0xff]
  %v821 = vld [vmem:[%s2 + $0x88] sm:$0xff]
  %v822 = vld [vmem:[%s2 + $0x90] sm:$0xff]
  %v823 = vld [vmem:[%s2 + $0x98] sm:$0xff]
  %v824 = vld [vmem:[%s2 + $0xa0] sm:$0xff]
  %v825 = vld [vmem:[%s2 + $0xa8] sm:$0xff]
  %v826 = vld [vmem:[%s2 + $0xb0] sm:$0xff]
  %v827 = vld [vmem:[%s2 + $0xb8] sm:$0xff]
  %v828 = vld [vmem:[%s2 + $0xc0] sm:$0xff]
  %v829 = vld [vmem:[%s2 + $0xc8] sm:$0xff]
  %v830 = vld [vmem:[%s2 + $0xd0] sm:$0xff]
  %v831 = vld [vmem:[%s2 + $0xd8] sm:$0xff]
  %v832 = vld [vmem:[%s2 + $0xe0] sm:$0xff]
  %v833 = vld [vmem:[%s2 + $0xe8] sm:$0xff]
  %v834 = vld [vmem:[%s2 + $0xf0] sm:$0xff]
  %v835 = vld [vmem:[%s2 + $0xf8] sm:$0xff]
  %v836 = vld [vmem:[%s2 + $0x100] sm:$0xff]
  %v837 = vld [vmem:[%s2 + $0x108] sm:$0xff]
  %v838 = vld [vmem:[%s2 + $0x110] sm:$0xff]
  %v839 = vld [vmem:[%s2 + $0x118] sm:$0xff]
  %v840 = vld [vmem:[%s2 + $0x120] sm:$0x1]
  %v841 = vlaneseq
  %v842 = vshrl.u32 %v841, 7
  %v843 = vsub.s32 0, %v842
  %v844 = vrot.slane %v840, %v843
  %vm845 = vcmask 261120
  %v847 = vsel %vm845, %v803, 0
  %849 = vmatprep.subr.mxu0 0.0
  %850 = vmatpush1.msra.mxu0 %v804
  %851 = vmatprep.subr.mxu0 0.0
  %852 = vmatpush1.msra.mxu0 %v805
  %853 = vmatprep.subr.mxu0 0.0
  %854 = vmatpush1.msra.mxu0 %v806
  %855 = vmatprep.subr.mxu0 0.0
  %856 = vmatpush1.msra.mxu0 %v807
  %857 = vmatprep.subr.mxu0 0.0
  %858 = vmatpush1.msra.mxu0 %v808
  %859 = vmatprep.subr.mxu0 0.0
  %860 = vmatpush1.msra.mxu0 %v809
  %861 = vmatprep.subr.mxu0 0.0
  %862 = vmatpush1.msra.mxu0 %v810
  %863 = vmatprep.subr.mxu0 0.0
  %864 = vmatpush1.msra.mxu0 %v811
  %865 = vmatprep.subr.mxu0 0.0
  %866 = vmatpush1.msra.mxu0 %v812
  %867 = vmatprep.subr.mxu0 0.0
  %868 = vmatpush1.msra.mxu0 %v813
  %869 = vmatprep.subr.mxu0 0.0
  %870 = vmatpush1.msra.mxu0 %v814
  %871 = vmatprep.subr.mxu0 0.0
  %872 = vmatpush1.msra.mxu0 %v815
  %873 = vmatprep.subr.mxu0 0.0
  %874 = vmatpush1.msra.mxu0 %v816
  %875 = vmatprep.subr.mxu0 0.0
  %876 = vmatpush1.msra.mxu0 %v817
  %877 = vmatprep.subr.mxu0 0.0
  %878 = vmatpush1.msra.mxu0 %v818
  %879 = vmatprep.subr.mxu0 0.0
  %880 = vmatpush1.msra.mxu0 %v819
  %881 = vmatprep.subr.mxu0 0.0
  %882 = vmatpush1.msra.mxu0 %v820
  %883 = vmatprep.subr.mxu0 0.0
  %884 = vmatpush1.msra.mxu0 %v821
  %885 = vmatprep.subr.mxu0 0.0
  %886 = vmatpush1.msra.mxu0 %v822
  %887 = vmatprep.subr.mxu0 0.0
  %888 = vmatpush1.msra.mxu0 %v823
  %889 = vmatprep.subr.mxu0 0.0
  %890 = vmatpush1.msra.mxu0 %v824
  %891 = vmatprep.subr.mxu0 0.0
  %892 = vmatpush1.msra.mxu0 %v825
  %893 = vmatprep.subr.mxu0 0.0
  %894 = vmatpush1.msra.mxu0 %v826
  %895 = vmatprep.subr.mxu0 0.0
  %896 = vmatpush1.msra.mxu0 %v827
  %897 = vmatprep.subr.mxu0 0.0
  %898 = vmatpush1.msra.mxu0 %v828
  %899 = vmatprep.subr.mxu0 0.0
  %900 = vmatpush1.msra.mxu0 %v829
  %901 = vmatprep.subr.mxu0 0.0
  %902 = vmatpush1.msra.mxu0 %v830
  %903 = vmatprep.subr.mxu0 0.0
  %904 = vmatpush1.msra.mxu0 %v831
  %905 = vmatprep.subr.mxu0 0.0
  %906 = vmatpush1.msra.mxu0 %v832
  %907 = vmatprep.subr.mxu0 0.0
  %908 = vmatpush1.msra.mxu0 %v833
  %909 = vmatprep.subr.mxu0 0.0
  %910 = vmatpush1.msra.mxu0 %v834
  %911 = vmatprep.subr.mxu0 0.0
  %912 = vmatpush1.msra.mxu0 %v835
  %913 = vmatprep.mubr.f32.mxu0 %v802
  %914 = vmatmul.mubr.f32.gmra.mrb[0].mxu0 %v801
  %v915 = vpop.f32.mrb[0].mxu0
  %v916 = vadd.f32 %v844, %v915
  %v917 = vpop.f32.mrb[0].mxu0
  %918 = vdwg.mxu0
  %919 = vmatprep.subr.mxu0 0.0
  %920 = vmatpush1.msra.mxu0 %v836
  %921 = vmatprep.subr.mxu0 0.0
  %922 = vmatpush1.msra.mxu0 %v837
  %923 = vmatprep.subr.mxu0 0.0
  %924 = vmatpush1.msra.mxu0 %v838
  %925 = vmatprep.subr.mxu0 0.0
  %926 = vmatpush1.msra.mxu0 %v839
  %927 = vmatprep.subr.mxu0 0.0
  %928 = vmatpush1.msra.mxu0 0.0
  %929 = vmatprep.subr.mxu0 0.0
  %930 = vmatpush1.msra.mxu0 0.0
  %931 = vmatprep.subr.mxu0 0.0
  %932 = vmatpush1.msra.mxu0 0.0
  %933 = vmatprep.subr.mxu0 0.0
  %934 = vmatpush1.msra.mxu0 0.0
  %935 = vmatprep.subr.mxu0 0.0
  %936 = vmatpush1.msra.mxu0 0.0
  %937 = vmatprep.subr.mxu0 0.0
  %938 = vmatpush1.msra.mxu0 0.0
  %939 = vmatprep.subr.mxu0 0.0
  %940 = vmatpush1.msra.mxu0 0.0
  %941 = vmatprep.subr.mxu0 0.0
  %942 = vmatpush1.msra.mxu0 0.0
  %943 = vmatprep.subr.mxu0 0.0
  %944 = vmatpush1.msra.mxu0 0.0
  %945 = vmatprep.subr.mxu0 0.0
  %946 = vmatpush1.msra.mxu0 0.0
  %947 = vmatprep.subr.mxu0 0.0
  %948 = vmatpush1.msra.mxu0 0.0
  %949 = vmatprep.subr.mxu0 0.0
  %950 = vmatpush1.msra.mxu0 0.0
  %951 = vmatprep.subr.mxu0 0.0
  %952 = vmatpush1.msra.mxu0 0.0
  %953 = vmatprep.subr.mxu0 0.0
  %954 = vmatpush1.msra.mxu0 0.0
  %955 = vmatprep.subr.mxu0 0.0
  %956 = vmatpush1.msra.mxu0 0.0
  %957 = vmatprep.subr.mxu0 0.0
  %958 = vmatpush1.msra.mxu0 0.0
  %959 = vmatprep.subr.mxu0 0.0
  %960 = vmatpush1.msra.mxu0 0.0
  %961 = vmatprep.subr.mxu0 0.0
  %962 = vmatpush1.msra.mxu0 0.0
  %963 = vmatprep.subr.mxu0 0.0
  %964 = vmatpush1.msra.mxu0 0.0
  %965 = vmatprep.subr.mxu0 0.0
  %966 = vmatpush1.msra.mxu0 0.0
  %967 = vmatprep.subr.mxu0 0.0
  %968 = vmatpush1.msra.mxu0 0.0
  %969 = vmatprep.subr.mxu0 0.0
  %970 = vmatpush1.msra.mxu0 0.0
  %971 = vmatprep.subr.mxu0 0.0
  %972 = vmatpush1.msra.mxu0 0.0
  %973 = vmatprep.subr.mxu0 0.0
  %974 = vmatpush1.msra.mxu0 0.0
  %975 = vmatprep.subr.mxu0 0.0
  %976 = vmatpush1.msra.mxu0 0.0
  %977 = vmatprep.subr.mxu0 0.0
  %978 = vmatpush1.msra.mxu0 0.0
  %979 = vmatprep.subr.mxu0 0.0
  %980 = vmatpush1.msra.mxu0 0.0
  %981 = vmatprep.subr.mxu0 0.0
  %982 = vmatpush1.msra.mxu0 0.0
  %983 = vmatprep.mubr.f32.mxu0 0.0
  %984 = vmatmul.mubr.f32.gmra.mrb[0].mxu0 %v847
  %v985 = vpop.f32.mrb[0].mxu0
  %v986 = vadd.f32 %v916, %v985
  %v987 = vpop.f32.mrb[0].mxu0
  %988 = vdwg.mxu0
  %v989 = vmax.f32 %v986, 0.0
  %v990 = vld [vmem:[%s2 + $0x128] sm:$0xff]
  %v991 = vld [vmem:[%s2 + $0x130] sm:$0xff]
  %v992 = vld [vmem:[%s2 + $0x138] sm:$0xff]
  %v993 = vld [vmem:[%s2 + $0x140] sm:$0xff]
  %v994 = vld [vmem:[%s2 + $0x148] sm:$0xff]
  %v995 = vld [vmem:[%s2 + $0x150] sm:$0xff]
  %v996 = vld [vmem:[%s2 + $0x158] sm:$0xff]
  %v997 = vld [vmem:[%s2 + $0x160] sm:$0xff]
  %v998 = vld [vmem:[%s2 + $0x168] sm:$0xff]
  %v999 = vld [vmem:[%s2 + $0x170] sm:$0xff]
  %v1000 = vld [vmem:[%s2 + $0x178] sm:$0xff]
  %v1001 = vld [vmem:[%s2 + $0x180] sm:$0xff]
  %v1002 = vld [vmem:[%s2 + $0x188] sm:$0xff]
  %v1003 = vld [vmem:[%s2 + $0x190] sm:$0xff]
  %v1004 = vld [vmem:[%s2 + $0x198] sm:$0xff]
  %v1005 = vld [vmem:[%s2 + $0x1a0] sm:$0xff]
  %v1006 = vld [vmem:[%s2 + $0x1a8] sm:$0x1]
  %v1007 = vlaneseq
  %v1008 = vshrl.u32 %v1007, 7
  %v1009 = vsub.s32 0, %v1008
  %v1010 = vrot.slane %v1006, %v1009
  %1011 = vmatprep.subr.mxu0 0.0
  %1012 = vmatpush1.msra.mxu0 %v990
  %1013 = vmatprep.subr.mxu0 0.0
  %1014 = vmatpush1.msra.mxu0 %v991
  %1015 = vmatprep.subr.mxu0 0.0
  %1016 = vmatpush1.msra.mxu0 %v992
  %1017 = vmatprep.subr.mxu0 0.0
  %1018 = vmatpush1.msra.mxu0 %v993
  %1019 = vmatprep.subr.mxu0 0.0
  %1020 = vmatpush1.msra.mxu0 %v994
  %1021 = vmatprep.subr.mxu0 0.0
  %1022 = vmatpush1.msra.mxu0 %v995
  %1023 = vmatprep.subr.mxu0 0.0
  %1024 = vmatpush1.msra.mxu0 %v996
  %1025 = vmatprep.subr.mxu0 0.0
  %1026 = vmatpush1.msra.mxu0 %v997
  %1027 = vmatprep.subr.mxu0 0.0
  %1028 = vmatpush1.msra.mxu0 %v998
  %1029 = vmatprep.subr.mxu0 0.0
  %1030 = vmatpush1.msra.mxu0 %v999
  %1031 = vmatprep.subr.mxu0 0.0
  %1032 = vmatpush1.msra.mxu0 %v1000
  %1033 = vmatprep.subr.mxu0 0.0
  %1034 = vmatpush1.msra.mxu0 %v1001
  %1035 = vmatprep.subr.mxu0 0.0
  %1036 = vmatpush1.msra.mxu0 %v1002
  %1037 = vmatprep.subr.mxu0 0.0
  %1038 = vmatpush1.msra.mxu0 %v1003
  %1039 = vmatprep.subr.mxu0 0.0
  %1040 = vmatpush1.msra.mxu0 %v1004
  %1041 = vmatprep.subr.mxu0 0.0
  %1042 = vmatpush1.msra.mxu0 %v1005
  %1043 = vmatprep.subr.mxu0 0.0
  %1044 = vmatpush1.msra.mxu0 0.0
  %1045 = vmatprep.subr.mxu0 0.0
  %1046 = vmatpush1.msra.mxu0 0.0
  %1047 = vmatprep.subr.mxu0 0.0
  %1048 = vmatpush1.msra.mxu0 0.0
  %1049 = vmatprep.subr.mxu0 0.0
  %1050 = vmatpush1.msra.mxu0 0.0
  %1051 = vmatprep.subr.mxu0 0.0
  %1052 = vmatpush1.msra.mxu0 0.0
  %1053 = vmatprep.subr.mxu0 0.0
  %1054 = vmatpush1.msra.mxu0 0.0
  %1055 = vmatprep.subr.mxu0 0.0
  %1056 = vmatpush1.msra.mxu0 0.0
  %1057 = vmatprep.subr.mxu0 0.0
  %1058 = vmatpush1.msra.mxu0 0.0
  %1059 = vmatprep.subr.mxu0 0.0
  %1060 = vmatpush1.msra.mxu0 0.0
  %1061 = vmatprep.subr.mxu0 0.0
  %1062 = vmatpush1.msra.mxu0 0.0
  %1063 = vmatprep.subr.mxu0 0.0
  %1064 = vmatpush1.msra.mxu0 0.0
  %1065 = vmatprep.subr.mxu0 0.0
  %1066 = vmatpush1.msra.mxu0 0.0
  %1067 = vmatprep.subr.mxu0 0.0
  %1068 = vmatpush1.msra.mxu0 0.0
  %1069 = vmatprep.subr.mxu0 0.0
  %1070 = vmatpush1.msra.mxu0 0.0
  %1071 = vmatprep.subr.mxu0 0.0
  %1072 = vmatpush1.msra.mxu0 0.0
  %1073 = vmatprep.subr.mxu0 0.0
  %1074 = vmatpush1.msra.mxu0 0.0
  %1075 = vmatprep.mubr.f32.mxu0 0.0
  %1076 = vmatmul.mubr.f32.gmra.mrb[0].mxu0 %v989
  %v1077 = vpop.f32.mrb[0].mxu0
  %v1078 = vadd.f32 %v1010, %v1077
  %v1079 = vpop.f32.mrb[0].mxu0
  %1080 = vdwg.mxu0
  %1081 = vst [vmem:[%s3] sm:$0xff] %v1078
  // Predicated region
  $region14: #{net2_forward.1} parent=0 // pred_check
    _
  $region15: #{net2_forward.1} parent=0 // pred_check_branch
    %1083 = sbr.rel (0) target = $region17
  $region16: #{net2_forward.1} parent=0 // pred_region
    _
  $region17: #{net2_forward.1} parent=0 // pred_fallthru
    _
  // Predicated region
  $region18: #{net2_forward.1} parent=0 // pred_check
    _
  $region19: #{net2_forward.1} parent=0 // pred_check_branch
    %1085 = sbr.rel (0) target = $region21
  $region20: #{net2_forward.1} parent=0 // pred_region
    _
  $region21: #{net2_forward.1} parent=0 // pred_fallthru
    _

</llo_original>
